<compile_context>
chip_gen: v6e
topology: v6e:2x2x1
jax: 0.10.0
libtpu: 0.0.40
codegen_flags: <defaults>
</compile_context>

<pallas_src>
import functools

import jax
import jax.numpy as jnp
from jax.experimental import pallas as pl
from jax.experimental.pallas import tpu as pltpu


def _fused_mlp5_kernel(x_ref, w1_ref, wh_ref, b_ref, o_ref):
    """Fused actor+critic 5-layer MLP.

    x_ref:  [B, F]          features
    w1_ref: [F, H]          layer-1 weight, H = H_pi + H_vf  (pi || vf columns)
    wh_ref: [4, H, H]       layers 2..5, block-diagonal (pi block, vf block)
    b_ref:  [5, H]          biases for layers 1..5 (pi || vf per row)
    o_ref:  [B, H]          fused output (pi lanes first, then vf lanes)
    """
    x = x_ref[...].astype(jnp.float32)

    # Layer 1 (+ ReLU).  Bias kept 2-D ([1, H]) so the add is a plain
    # sublane-broadcast on the VPU.
    h = jnp.dot(x, w1_ref[...], preferred_element_type=jnp.float32) + b_ref[0:1, :]
    h = jnp.maximum(h, 0.0)

    # Layers 2..5 (ReLU after 2, 3, 4; none after 5).  Static Python unroll:
    # 4 back-to-back MXU dots on the same [B, H] tile.
    for i in range(4):
        h = jnp.dot(h, wh_ref[i], preferred_element_type=jnp.float32) + b_ref[i + 1:i + 2, :]
        if i < 3:
            h = jnp.maximum(h, 0.0)

    o_ref[...] = h.astype(o_ref.dtype)


@functools.partial(jax.jit, static_argnames=("h_pi",))
def _fused_forward(features, w1, wh, b, *, h_pi):
    """Runs the fused kernel and splits the lane-dense output into (pi, vf)."""
    B = features.shape[0]
    H = w1.shape[1]

    out = pl.pallas_call(
        _fused_mlp5_kernel,
        out_shape=jax.ShapeDtypeStruct((B, H), jnp.float32),
        in_specs=[pl.BlockSpec(memory_space=pltpu.VMEM)] * 4,
        out_specs=pl.BlockSpec(memory_space=pltpu.VMEM),
    )(features, w1, wh, b)

    # Slice outside the kernel: keeps the in-kernel store full-width; the
    # split itself is a trivial XLA slice.
    return out[:, :h_pi], out[:, h_pi:]


def _init_linear(key, in_dim, out_dim):
    """Deterministic init mimicking PyTorch's default Linear init.

    Weight returned as [in, out] (transposed from PyTorch's [out, in])."""
    kw, kb = jax.random.split(key)
    bound = 1.0 / jnp.sqrt(jnp.float32(in_dim))
    w = jax.random.uniform(kw, (in_dim, out_dim), jnp.float32, -bound, bound)
    b = jax.random.uniform(kb, (out_dim,), jnp.float32, -bound, bound)
    return w, b


class ModelLearnerNetworkPallas:
    """JAX/Pallas equivalent of the PyTorch ModelLearnerNetwork forward pass."""

    def __init__(self, feature_dim: int,
                 last_layer_dim_pi: int = 64,
                 last_layer_dim_vf: int = 64,
                 seed: int = 0):
        self.latent_dim_pi = last_layer_dim_pi
        self.latent_dim_vf = last_layer_dim_vf

        key = jax.random.PRNGKey(seed)
        keys = jax.random.split(key, 10)

        pi_dims = [feature_dim] + [last_layer_dim_pi] * 5
        vf_dims = [feature_dim] + [last_layer_dim_vf] * 5

        # Per-head parameters (kept for reference / inspection).
        self.pi_w, self.pi_b = [], []
        for i in range(5):
            w, b = _init_linear(keys[i], pi_dims[i], pi_dims[i + 1])
            self.pi_w.append(w)
            self.pi_b.append(b)

        self.vf_w, self.vf_b = [], []
        for i in range(5):
            w, b = _init_linear(keys[5 + i], vf_dims[i], vf_dims[i + 1])
            self.vf_w.append(w)
            self.vf_b.append(b)

        # ---- Packed, fused parameters for the kernel ----
        H_pi, H_vf = last_layer_dim_pi, last_layer_dim_vf
        H = H_pi + H_vf

        # Layer 1: [F, H]  (pi columns first, then vf columns).
        self.fused_w1 = jnp.concatenate([self.pi_w[0], self.vf_w[0]], axis=1)

        # Layers 2..5: block-diagonal [H, H] stacked into [4, H, H].
        wh = []
        for i in range(1, 5):
            wd = jnp.zeros((H, H), jnp.float32)
            wd = wd.at[:H_pi, :H_pi].set(self.pi_w[i])
            wd = wd.at[H_pi:, H_pi:].set(self.vf_w[i])
            wh.append(wd)
        self.fused_wh = jnp.stack(wh, axis=0)

        # Biases: [5, H]  (pi || vf per layer).
        self.fused_b = jnp.stack(
            [jnp.concatenate([self.pi_b[i], self.vf_b[i]], axis=0) for i in range(5)],
            axis=0,
        )

    # --- Forward API (matches the PyTorch module) ---
    def forward(self, features):
        return _fused_forward(features, self.fused_w1, self.fused_wh,
                              self.fused_b, h_pi=self.latent_dim_pi)

    def forward_actor(self, features):
        # Fused kernel computes both heads; at these shapes the extra head is
        # free relative to launch/DMA overhead.
        return self.forward(features)[0]

    def forward_critic(self, features):
        return self.forward(features)[1]


def _reference_mlp5(features, weights, biases):
    h = features
    for i, (w, b) in enumerate(zip(weights, biases)):
        h = h @ w + b[None, :]
        if i < len(weights) - 1:
            h = jnp.maximum(h, 0.0)
    return h


if __name__ == "__main__":
    feature_dim = 32
    batch = 8

    net = ModelLearnerNetworkPallas(feature_dim, 64, 64, seed=0)

    key = jax.random.PRNGKey(0)
    features = jax.random.normal(key, (batch, feature_dim), jnp.float32)

    latent_pi, latent_vf = net.forward(features)
    latent_pi = jax.block_until_ready(latent_pi)
    latent_vf = jax.block_until_ready(latent_vf)

    # Correctness check against a pure-JAX per-head reference.
    ref_pi = _reference_mlp5(features, net.pi_w, net.pi_b)
    ref_vf = _reference_mlp5(features, net.vf_w, net.vf_b)

    assert latent_pi.shape == (batch, 64)
    assert latent_vf.shape == (batch, 64)
    assert jnp.allclose(latent_pi, ref_pi, atol=1e-4, rtol=1e-4)
    assert jnp.allclose(latent_vf, ref_vf, atol=1e-4, rtol=1e-4)

    print("KERNEL_OK")
</pallas_src>

<mosaic_0001>
module attributes {stable_mosaic.version = 11 : i64} {
  func.func @_fused_mlp5_kernel(%arg0: memref<8x32xf32, #tpu.memory_space<vmem>>, %arg1: memref<32x128xf32, #tpu.memory_space<vmem>>, %arg2: memref<4x128x128xf32, #tpu.memory_space<vmem>>, %arg3: memref<5x128xf32, #tpu.memory_space<vmem>>, %arg4: memref<8x128xf32, #tpu.memory_space<vmem>>) attributes {dimension_semantics = [], scalar_prefetch = 0 : i64, scratch_operands = 0 : i64, tpu.core_type = #tpu.core_type<tc>} {
    %c0 = arith.constant 0 : index
    %c0_0 = arith.constant 0 : index
    %0 = vector.load %arg0[%c0, %c0_0] : memref<8x32xf32, #tpu.memory_space<vmem>>, vector<8x32xf32>
    %c0_1 = arith.constant 0 : index
    %c0_2 = arith.constant 0 : index
    %1 = vector.load %arg1[%c0_1, %c0_2] : memref<32x128xf32, #tpu.memory_space<vmem>>, vector<32x128xf32>
    %cst = arith.constant dense<0.000000e+00> : vector<8x128xf32>
    %2 = tpu.matmul %0, %1, %cst {dimension_numbers = #tpu.dot_dimension_numbers<[1], [0], [0], [1], [0, 0, 1, 1], [], []>} : vector<8x32xf32>, vector<32x128xf32>, vector<8x128xf32> -> vector<8x128xf32>
    %c0_3 = arith.constant 0 : index
    %c0_4 = arith.constant 0 : index
    %3 = vector.load %arg3[%c0_3, %c0_4] : memref<5x128xf32, #tpu.memory_space<vmem>>, vector<1x128xf32>
    %4 = vector.broadcast %3 : vector<1x128xf32> to vector<8x128xf32>
    %5 = arith.addf %2, %4 : vector<8x128xf32>
    %cst_5 = arith.constant 0.000000e+00 : f32
    %6 = vector.broadcast %cst_5 : f32 to vector<8x128xf32>
    %7 = arith.maximumf %5, %6 : vector<8x128xf32>
    %c0_6 = arith.constant 0 : index
    %c0_7 = arith.constant 0 : index
    %c0_8 = arith.constant 0 : index
    %8 = vector.load %arg2[%c0_6, %c0_7, %c0_8] : memref<4x128x128xf32, #tpu.memory_space<vmem>>, vector<1x128x128xf32>
    %9 = vector.shape_cast %8 : vector<1x128x128xf32> to vector<128x128xf32>
    %cst_9 = arith.constant dense<0.000000e+00> : vector<8x128xf32>
    %10 = tpu.matmul %7, %9, %cst_9 {dimension_numbers = #tpu.dot_dimension_numbers<[1], [0], [0], [1], [0, 0, 1, 1], [], []>} : vector<8x128xf32>, vector<128x128xf32>, vector<8x128xf32> -> vector<8x128xf32>
    %c1 = arith.constant 1 : index
    %c0_10 = arith.constant 0 : index
    %11 = vector.load %arg3[%c1, %c0_10] : memref<5x128xf32, #tpu.memory_space<vmem>>, vector<1x128xf32>
    %12 = vector.broadcast %11 : vector<1x128xf32> to vector<8x128xf32>
    %13 = arith.addf %10, %12 : vector<8x128xf32>
    %cst_11 = arith.constant 0.000000e+00 : f32
    %14 = vector.broadcast %cst_11 : f32 to vector<8x128xf32>
    %15 = arith.maximumf %13, %14 : vector<8x128xf32>
    %c1_12 = arith.constant 1 : index
    %c0_13 = arith.constant 0 : index
    %c0_14 = arith.constant 0 : index
    %16 = vector.load %arg2[%c1_12, %c0_13, %c0_14] : memref<4x128x128xf32, #tpu.memory_space<vmem>>, vector<1x128x128xf32>
    %17 = vector.shape_cast %16 : vector<1x128x128xf32> to vector<128x128xf32>
    %cst_15 = arith.constant dense<0.000000e+00> : vector<8x128xf32>
    %18 = tpu.matmul %15, %17, %cst_15 {dimension_numbers = #tpu.dot_dimension_numbers<[1], [0], [0], [1], [0, 0, 1, 1], [], []>} : vector<8x128xf32>, vector<128x128xf32>, vector<8x128xf32> -> vector<8x128xf32>
    %c2 = arith.constant 2 : index
    %c0_16 = arith.constant 0 : index
    %19 = vector.load %arg3[%c2, %c0_16] : memref<5x128xf32, #tpu.memory_space<vmem>>, vector<1x128xf32>
    %20 = vector.broadcast %19 : vector<1x128xf32> to vector<8x128xf32>
    %21 = arith.addf %18, %20 : vector<8x128xf32>
    %cst_17 = arith.constant 0.000000e+00 : f32
    %22 = vector.broadcast %cst_17 : f32 to vector<8x128xf32>
    %23 = arith.maximumf %21, %22 : vector<8x128xf32>
    %c2_18 = arith.constant 2 : index
    %c0_19 = arith.constant 0 : index
    %c0_20 = arith.constant 0 : index
    %24 = vector.load %arg2[%c2_18, %c0_19, %c0_20] : memref<4x128x128xf32, #tpu.memory_space<vmem>>, vector<1x128x128xf32>
    %25 = vector.shape_cast %24 : vector<1x128x128xf32> to vector<128x128xf32>
    %cst_21 = arith.constant dense<0.000000e+00> : vector<8x128xf32>
    %26 = tpu.matmul %23, %25, %cst_21 {dimension_numbers = #tpu.dot_dimension_numbers<[1], [0], [0], [1], [0, 0, 1, 1], [], []>} : vector<8x128xf32>, vector<128x128xf32>, vector<8x128xf32> -> vector<8x128xf32>
    %c3 = arith.constant 3 : index
    %c0_22 = arith.constant 0 : index
    %27 = vector.load %arg3[%c3, %c0_22] : memref<5x128xf32, #tpu.memory_space<vmem>>, vector<1x128xf32>
    %28 = vector.broadcast %27 : vector<1x128xf32> to vector<8x128xf32>
    %29 = arith.addf %26, %28 : vector<8x128xf32>
    %cst_23 = arith.constant 0.000000e+00 : f32
    %30 = vector.broadcast %cst_23 : f32 to vector<8x128xf32>
    %31 = arith.maximumf %29, %30 : vector<8x128xf32>
    %c3_24 = arith.constant 3 : index
    %c0_25 = arith.constant 0 : index
    %c0_26 = arith.constant 0 : index
    %32 = vector.load %arg2[%c3_24, %c0_25, %c0_26] : memref<4x128x128xf32, #tpu.memory_space<vmem>>, vector<1x128x128xf32>
    %33 = vector.shape_cast %32 : vector<1x128x128xf32> to vector<128x128xf32>
    %cst_27 = arith.constant dense<0.000000e+00> : vector<8x128xf32>
    %34 = tpu.matmul %31, %33, %cst_27 {dimension_numbers = #tpu.dot_dimension_numbers<[1], [0], [0], [1], [0, 0, 1, 1], [], []>} : vector<8x128xf32>, vector<128x128xf32>, vector<8x128xf32> -> vector<8x128xf32>
    %c4 = arith.constant 4 : index
    %c0_28 = arith.constant 0 : index
    %35 = vector.load %arg3[%c4, %c0_28] : memref<5x128xf32, #tpu.memory_space<vmem>>, vector<1x128xf32>
    %36 = vector.broadcast %35 : vector<1x128xf32> to vector<8x128xf32>
    %37 = arith.addf %34, %36 : vector<8x128xf32>
    %c0_29 = arith.constant 0 : index
    %c0_30 = arith.constant 0 : index
    %38 = vector.load %arg4[%c0_29, %c0_30] : memref<8x128xf32, #tpu.memory_space<vmem>>, vector<8x128xf32>
    tpu.vector_store %arg4[%c0_29, %c0_30], %37 {strides = array<i32>} : memref<8x128xf32, #tpu.memory_space<vmem>>, vector<8x128xf32>,
    return
  }
}

</mosaic_0001>

<llo_original>
// kernel: _fused_forward.1
$region0: #{_fused_forward.1}
  #allocation0 [shape = 'u32[]', space=smem, size = 0x4, offset = 0x4, fixed_abs, tag = 'smem constant byte address 0x4 - core index']
  #allocation1 [shape = 'u32[144,128]{1,0:T(1,128)}', space=vmem, size = 0x12000, scoped, tag = 'internal scratch']
  %s0 = inlined_call_operand.hbm [shape: f32[8,32], index: 0, kind: input, shape index: {}]
  %s1 = inlined_call_operand.hbm [shape: f32[32,128], index: 1, kind: input, shape index: {}]
  %s2 = inlined_call_operand.hbm [shape: f32[4,128,128], index: 2, kind: input, shape index: {}]
  %s3 = inlined_call_operand.hbm [shape: f32[5,128], index: 3, kind: input, shape index: {}]
  %s4 = inlined_call_operand.vmem [shape: f32[8,128], index: 4, kind: output, shape index: {}]
  %s5 = sld [smem:[#allocation0]]
  $region42: #{_fused_forward.1} parent=0
    _
  %s7 = ssub.s32 1, %s5
  %s8 = scalar_select 0, %s7, %s5
  $region1: #{_fused_forward.1} parent=0
    #allocation2 [shape = 'u8[4096]{0}', space=vmem, size = 0x1000, scoped, tag = 'input window, operand 0, single buffered']
    #allocation3 [shape = 's32[1]{0}', space=sflag, size = 0x4, scoped, tag = 'scoped memory for _fused_forward.1']
    #allocation4 [shape = 'u8[16384]{0}', space=vmem, size = 0x4000, scoped, tag = 'input window, operand 1, single buffered']
    #allocation5 [shape = 's32[1]{0}', space=sflag, size = 0x4, scoped, tag = 'scoped memory for _fused_forward.1']
    #allocation6 [shape = 'u8[262144]{0}', space=vmem, size = 0x40000, scoped, tag = 'input window, operand 2, single buffered']
    #allocation7 [shape = 'u8[4096]{0}', space=vmem, size = 0x1000, scoped, tag = 'input window, operand 3, single buffered']
    #allocation8 [shape = 's32[1]{0}', space=sflag, size = 0x4, scoped, tag = 'scoped memory for _fused_forward.1']
    %9 = vsyncpa [#allocation3], 0
    %10 = vsyncpa [#allocation5], 0
    %11 = vsyncpa [#allocation8], 0
    // Predicated region
    $region2: #{_fused_forward.1} parent=1 // pred_check
      _
    $region3: #{_fused_forward.1} parent=1 // pred_check_branch
      %13 = sbr.rel (0) target = $region5
    $region4: #{_fused_forward.1} parent=1 // pred_region
      %s15 = ssub.s32 128, 128
      %16 = vsyncadd [#allocation3], %s15
      %s18 = sshll.u32 [#allocation2], 4
      %s19 = int_to_ptr.vmem [resolvable:$true] %s18
      %21 = dma.hbm_to_vmem [thread:$0]  %s0, 128, %s19, [#allocation3]
    $region5: #{_fused_forward.1} parent=1 // pred_fallthru
      _
    // Predicated region
    $region6: #{_fused_forward.1} parent=1 // pred_check
      _
    $region7: #{_fused_forward.1} parent=1 // pred_check_branch
      %23 = sbr.rel (0) target = $region9
    $region8: #{_fused_forward.1} parent=1 // pred_region
      %s25 = ssub.s32 512, 512
      %26 = vsyncadd [#allocation5], %s25
      %s27 = sshll.u32 [#allocation4], 4
      %s28 = int_to_ptr.vmem [resolvable:$true] %s27
      %33 = dma.hbm_to_vmem [thread:$0]  %s1, 512, %s28, [#allocation5], 128, 128, 8
    $region9: #{_fused_forward.1} parent=1 // pred_fallthru
      _
    // Predicated region
    $region10: #{_fused_forward.1} parent=1 // pred_check
      _
    $region11: #{_fused_forward.1} parent=1 // pred_check_branch
      %35 = sbr.rel (0) target = $region13
    $region12: #{_fused_forward.1} parent=1 // pred_region
      %s37 = ssub.s32 8192, 8192
      %38 = vsyncadd [#allocation5], %s37
      %s39 = sshll.u32 [#allocation6], 4
      %s40 = int_to_ptr.vmem [resolvable:$true] %s39
      %45 = dma.hbm_to_vmem [thread:$0]  %s2, 8192, %s40, [#allocation5], 128, 128, 8
    $region13: #{_fused_forward.1} parent=1 // pred_fallthru
      _
    // Predicated region
    $region14: #{_fused_forward.1} parent=1 // pred_check
      _
    $region15: #{_fused_forward.1} parent=1 // pred_check_branch
      %47 = sbr.rel (0) target = $region17
    $region16: #{_fused_forward.1} parent=1 // pred_region
      %s49 = ssub.s32 128, 128
      %50 = vsyncadd [#allocation8], %s49
      %s52 = sshll.u32 [#allocation7], 4
      %s53 = int_to_ptr.vmem [resolvable:$true] %s52
      %55 = dma.hbm_to_vmem [thread:$0]  %s3, 128, %s53, [#allocation8]
    $region17: #{_fused_forward.1} parent=1 // pred_fallthru
      _
    // Predicated region
    $region18: #{_fused_forward.1} parent=1 // pred_check
      _
    $region19: #{_fused_forward.1} parent=1 // pred_check_branch
      %57 = sbr.rel (0) target = $region21
    $region20: #{_fused_forward.1} parent=1 // pred_region
      %58 = dma.done [#allocation3], 128
    $region21: #{_fused_forward.1} parent=1 // pred_fallthru
      _
    // Predicated region
    $region22: #{_fused_forward.1} parent=1 // pred_check
      _
    $region23: #{_fused_forward.1} parent=1 // pred_check_branch
      %60 = sbr.rel (0) target = $region25
    $region24: #{_fused_forward.1} parent=1 // pred_region
      %61 = dma.done [#allocation5], 512
    $region25: #{_fused_forward.1} parent=1 // pred_fallthru
      _
    // Predicated region
    $region26: #{_fused_forward.1} parent=1 // pred_check
      _
    $region27: #{_fused_forward.1} parent=1 // pred_check_branch
      %63 = sbr.rel (0) target = $region29
    $region28: #{_fused_forward.1} parent=1 // pred_region
      %64 = dma.done [#allocation5], 8192
    $region29: #{_fused_forward.1} parent=1 // pred_fallthru
      _
    // Predicated region
    $region30: #{_fused_forward.1} parent=1 // pred_check
      _
    $region31: #{_fused_forward.1} parent=1 // pred_check_branch
      %66 = sbr.rel (0) target = $region33
    $region32: #{_fused_forward.1} parent=1 // pred_region
      %67 = dma.done [#allocation8], 128
    $region33: #{_fused_forward.1} parent=1 // pred_fallthru
      _
    %v68 = vld [vmem:[#allocation2] sm:$0xff]
    %v69 = vld [vmem:[#allocation4] sm:$0xff]
    %v70 = vld [vmem:[#allocation4 + $0x8] sm:$0xff]
    %v71 = vld [vmem:[#allocation4 + $0x10] sm:$0xff]
    %v72 = vld [vmem:[#allocation4 + $0x18] sm:$0xff]
    %v73 = vld [vmem:[#allocation7] sm:$0x1]
    %v74 = vlaneseq
    %v75 = vshrl.u32 %v74, 7
    %v76 = vsub.s32 0, %v75
    %v77 = vrot.slane %v73, %v76
    %vm78 = vcmask 261120
    %v80 = vsel %vm78, %v68, 0
    %82 = vmatprep.subr.mxu0 0.0
    %83 = vmatpush1.msra.mxu0 0.0
    %84 = vmatprep.subr.mxu0 0.0
    %85 = vmatpush1.msra.mxu0 0.0
    %86 = vmatprep.subr.mxu0 0.0
    %87 = vmatpush1.msra.mxu0 0.0
    %88 = vmatprep.subr.mxu0 0.0
    %89 = vmatpush1.msra.mxu0 0.0
    %90 = vmatprep.subr.mxu0 0.0
    %91 = vmatpush1.msra.mxu0 0.0
    %92 = vmatprep.subr.mxu0 0.0
    %93 = vmatpush1.msra.mxu0 0.0
    %94 = vmatprep.subr.mxu0 0.0
    %95 = vmatpush1.msra.mxu0 0.0
    %96 = vmatprep.subr.mxu0 0.0
    %97 = vmatpush1.msra.mxu0 0.0
    %98 = vmatprep.subr.mxu0 0.0
    %99 = vmatpush1.msra.mxu0 0.0
    %100 = vmatprep.subr.mxu0 0.0
    %101 = vmatpush1.msra.mxu0 0.0
    %102 = vmatprep.subr.mxu0 0.0
    %103 = vmatpush1.msra.mxu0 0.0
    %104 = vmatprep.subr.mxu0 0.0
    %105 = vmatpush1.msra.mxu0 0.0
    %106 = vmatprep.subr.mxu0 0.0
    %107 = vmatpush1.msra.mxu0 %v72
    %108 = vmatprep.subr.mxu0 0.0
    %109 = vmatpush1.msra.mxu0 %v71
    %110 = vmatprep.subr.mxu0 0.0
    %111 = vmatpush1.msra.mxu0 %v70
    %112 = vmatprep.subr.mxu0 0.0
    %113 = vmatpush1.msra.mxu0 %v69
    %114 = vmatprep.subr.mxu0 0.0
    %115 = vmatpush2.msra.mxu0 0.0
    %116 = vmatprep.subr.mxu0 0.0
    %117 = vmatpush2.msra.mxu0 0.0
    %118 = vmatprep.subr.mxu0 0.0
    %119 = vmatpush2.msra.mxu0 0.0
    %120 = vmatprep.subr.mxu0 0.0
    %121 = vmatpush2.msra.mxu0 0.0
    %122 = vmatprep.subr.mxu0 0.0
    %123 = vmatpush2.msra.mxu0 0.0
    %124 = vmatprep.subr.mxu0 0.0
    %125 = vmatpush2.msra.mxu0 0.0
    %126 = vmatprep.subr.mxu0 0.0
    %127 = vmatpush2.msra.mxu0 0.0
    %128 = vmatprep.subr.mxu0 0.0
    %129 = vmatpush2.msra.mxu0 0.0
    %130 = vmatprep.subr.mxu0 0.0
    %131 = vmatpush2.msra.mxu0 0.0
    %132 = vmatprep.subr.mxu0 0.0
    %133 = vmatpush2.msra.mxu0 0.0
    %134 = vmatprep.subr.mxu0 0.0
    %135 = vmatpush2.msra.mxu0 0.0
    %136 = vmatprep.subr.mxu0 0.0
    %137 = vmatpush2.msra.mxu0 0.0
    %138 = vmatprep.subr.mxu0 0.0
    %139 = vmatpush2.msra.mxu0 0.0
    %140 = vmatprep.subr.mxu0 0.0
    %141 = vmatpush2.msra.mxu0 0.0
    %142 = vmatprep.subr.mxu0 0.0
    %143 = vmatpush2.msra.mxu0 0.0
    %144 = vmatprep.subr.mxu0 0.0
    %145 = vmatpush2.msra.mxu0 0.0
    %146 = vmatprep.mubr.f32.mxu0 0.0
    %147 = vmatmul.mubr.f32.gmra.mxu0 %v80
    %v148 = vpop.f32.mrf.mxu0
    %v149 = vadd.f32 %v77, %v148
    %v150 = vpop.f32.mrf.mxu0
    %151 = vdwg.mxu0
    %v152 = vmax.f32 %v149, 0.0
    %v153 = vld [vmem:[#allocation6] sm:$0xff]
    %v154 = vld [vmem:[#allocation6 + $0x8] sm:$0xff]
    %v155 = vld [vmem:[#allocation6 + $0x10] sm:$0xff]
    %v156 = vld [vmem:[#allocation6 + $0x18] sm:$0xff]
    %v157 = vld [vmem:[#allocation6 + $0x20] sm:$0xff]
    %v158 = vld [vmem:[#allocation6 + $0x28] sm:$0xff]
    %v159 = vld [vmem:[#allocation6 + $0x30] sm:$0xff]
    %v160 = vld [vmem:[#allocation6 + $0x38] sm:$0xff]
    %v161 = vld [vmem:[#allocation6 + $0x40] sm:$0xff]
    %v162 = vld [vmem:[#allocation6 + $0x48] sm:$0xff]
    %v163 = vld [vmem:[#allocation6 + $0x50] sm:$0xff]
    %v164 = vld [vmem:[#allocation6 + $0x58] sm:$0xff]
    %v165 = vld [vmem:[#allocation6 + $0x60] sm:$0xff]
    %v166 = vld [vmem:[#allocation6 + $0x68] sm:$0xff]
    %v167 = vld [vmem:[#allocation6 + $0x70] sm:$0xff]
    %v168 = vld [vmem:[#allocation6 + $0x78] sm:$0xff]
    %v169 = vld [vmem:[#allocation7 + $0x1] sm:$0x1]
    %v170 = vlaneseq
    %v171 = vshrl.u32 %v170, 7
    %v172 = vsub.s32 0, %v171
    %v173 = vrot.slane %v169, %v172
    %174 = vmatprep.subr.mxu0 0.0
    %175 = vmatpush1.msra.mxu0 %v168
    %176 = vmatprep.subr.mxu0 0.0
    %177 = vmatpush1.msra.mxu0 %v167
    %178 = vmatprep.subr.mxu0 0.0
    %179 = vmatpush1.msra.mxu0 %v166
    %180 = vmatprep.subr.mxu0 0.0
    %181 = vmatpush1.msra.mxu0 %v165
    %182 = vmatprep.subr.mxu0 0.0
    %183 = vmatpush1.msra.mxu0 %v164
    %184 = vmatprep.subr.mxu0 0.0
    %185 = vmatpush1.msra.mxu0 %v163
    %186 = vmatprep.subr.mxu0 0.0
    %187 = vmatpush1.msra.mxu0 %v162
    %188 = vmatprep.subr.mxu0 0.0
    %189 = vmatpush1.msra.mxu0 %v161
    %190 = vmatprep.subr.mxu0 0.0
    %191 = vmatpush1.msra.mxu0 %v160
    %192 = vmatprep.subr.mxu0 0.0
    %193 = vmatpush1.msra.mxu0 %v159
    %194 = vmatprep.subr.mxu0 0.0
    %195 = vmatpush1.msra.mxu0 %v158
    %196 = vmatprep.subr.mxu0 0.0
    %197 = vmatpush1.msra.mxu0 %v157
    %198 = vmatprep.subr.mxu0 0.0
    %199 = vmatpush1.msra.mxu0 %v156
    %200 = vmatprep.subr.mxu0 0.0
    %201 = vmatpush1.msra.mxu0 %v155
    %202 = vmatprep.subr.mxu0 0.0
    %203 = vmatpush1.msra.mxu0 %v154
    %204 = vmatprep.subr.mxu0 0.0
    %205 = vmatpush1.msra.mxu0 %v153
    %206 = vmatprep.subr.mxu0 0.0
    %207 = vmatpush2.msra.mxu0 0.0
    %208 = vmatprep.subr.mxu0 0.0
    %209 = vmatpush2.msra.mxu0 0.0
    %210 = vmatprep.subr.mxu0 0.0
    %211 = vmatpush2.msra.mxu0 0.0
    %212 = vmatprep.subr.mxu0 0.0
    %213 = vmatpush2.msra.mxu0 0.0
    %214 = vmatprep.subr.mxu0 0.0
    %215 = vmatpush2.msra.mxu0 0.0
    %216 = vmatprep.subr.mxu0 0.0
    %217 = vmatpush2.msra.mxu0 0.0
    %218 = vmatprep.subr.mxu0 0.0
    %219 = vmatpush2.msra.mxu0 0.0
    %220 = vmatprep.subr.mxu0 0.0
    %221 = vmatpush2.msra.mxu0 0.0
    %222 = vmatprep.subr.mxu0 0.0
    %223 = vmatpush2.msra.mxu0 0.0
    %224 = vmatprep.subr.mxu0 0.0
    %225 = vmatpush2.msra.mxu0 0.0
    %226 = vmatprep.subr.mxu0 0.0
    %227 = vmatpush2.msra.mxu0 0.0
    %228 = vmatprep.subr.mxu0 0.0
    %229 = vmatpush2.msra.mxu0 0.0
    %230 = vmatprep.subr.mxu0 0.0
    %231 = vmatpush2.msra.mxu0 0.0
    %232 = vmatprep.subr.mxu0 0.0
    %233 = vmatpush2.msra.mxu0 0.0
    %234 = vmatprep.subr.mxu0 0.0
    %235 = vmatpush2.msra.mxu0 0.0
    %236 = vmatprep.subr.mxu0 0.0
    %237 = vmatpush2.msra.mxu0 0.0
    %238 = vmatprep.mubr.f32.mxu0 0.0
    %239 = vmatmul.mubr.f32.gmra.mxu0 %v152
    %v240 = vpop.f32.mrf.mxu0
    %v241 = vadd.f32 %v173, %v240
    %v242 = vpop.f32.mrf.mxu0
    %243 = vdwg.mxu0
    %v244 = vmax.f32 %v241, 0.0
    %s245 = scalar_lea.vmem [#allocation6], 128
    %v246 = vld [vmem:[%s245] sm:$0xff]
    %v247 = vld [vmem:[%s245 + $0x8] sm:$0xff]
    %v248 = vld [vmem:[%s245 + $0x10] sm:$0xff]
    %v249 = vld [vmem:[%s245 + $0x18] sm:$0xff]
    %v250 = vld [vmem:[%s245 + $0x20] sm:$0xff]
    %v251 = vld [vmem:[%s245 + $0x28] sm:$0xff]
    %v252 = vld [vmem:[%s245 + $0x30] sm:$0xff]
    %v253 = vld [vmem:[%s245 + $0x38] sm:$0xff]
    %v254 = vld [vmem:[%s245 + $0x40] sm:$0xff]
    %v255 = vld [vmem:[%s245 + $0x48] sm:$0xff]
    %v256 = vld [vmem:[%s245 + $0x50] sm:$0xff]
    %v257 = vld [vmem:[%s245 + $0x58] sm:$0xff]
    %v258 = vld [vmem:[%s245 + $0x60] sm:$0xff]
    %v259 = vld [vmem:[%s245 + $0x68] sm:$0xff]
    %v260 = vld [vmem:[%s245 + $0x70] sm:$0xff]
    %v261 = vld [vmem:[%s245 + $0x78] sm:$0xff]
    %v262 = vld [vmem:[#allocation7 + $0x2] sm:$0x1]
    %v263 = vlaneseq
    %v264 = vshrl.u32 %v263, 7
    %v265 = vsub.s32 0, %v264
    %v266 = vrot.slane %v262, %v265
    %267 = vmatprep.subr.mxu0 0.0
    %268 = vmatpush1.msra.mxu0 %v261
    %269 = vmatprep.subr.mxu0 0.0
    %270 = vmatpush1.msra.mxu0 %v260
    %271 = vmatprep.subr.mxu0 0.0
    %272 = vmatpush1.msra.mxu0 %v259
    %273 = vmatprep.subr.mxu0 0.0
    %274 = vmatpush1.msra.mxu0 %v258
    %275 = vmatprep.subr.mxu0 0.0
    %276 = vmatpush1.msra.mxu0 %v257
    %277 = vmatprep.subr.mxu0 0.0
    %278 = vmatpush1.msra.mxu0 %v256
    %279 = vmatprep.subr.mxu0 0.0
    %280 = vmatpush1.msra.mxu0 %v255
    %281 = vmatprep.subr.mxu0 0.0
    %282 = vmatpush1.msra.mxu0 %v254
    %283 = vmatprep.subr.mxu0 0.0
    %284 = vmatpush1.msra.mxu0 %v253
    %285 = vmatprep.subr.mxu0 0.0
    %286 = vmatpush1.msra.mxu0 %v252
    %287 = vmatprep.subr.mxu0 0.0
    %288 = vmatpush1.msra.mxu0 %v251
    %289 = vmatprep.subr.mxu0 0.0
    %290 = vmatpush1.msra.mxu0 %v250
    %291 = vmatprep.subr.mxu0 0.0
    %292 = vmatpush1.msra.mxu0 %v249
    %293 = vmatprep.subr.mxu0 0.0
    %294 = vmatpush1.msra.mxu0 %v248
    %295 = vmatprep.subr.mxu0 0.0
    %296 = vmatpush1.msra.mxu0 %v247
    %297 = vmatprep.subr.mxu0 0.0
    %298 = vmatpush1.msra.mxu0 %v246
    %299 = vmatprep.subr.mxu0 0.0
    %300 = vmatpush2.msra.mxu0 0.0
    %301 = vmatprep.subr.mxu0 0.0
    %302 = vmatpush2.msra.mxu0 0.0
    %303 = vmatprep.subr.mxu0 0.0
    %304 = vmatpush2.msra.mxu0 0.0
    %305 = vmatprep.subr.mxu0 0.0
    %306 = vmatpush2.msra.mxu0 0.0
    %307 = vmatprep.subr.mxu0 0.0
    %308 = vmatpush2.msra.mxu0 0.0
    %309 = vmatprep.subr.mxu0 0.0
    %310 = vmatpush2.msra.mxu0 0.0
    %311 = vmatprep.subr.mxu0 0.0
    %312 = vmatpush2.msra.mxu0 0.0
    %313 = vmatprep.subr.mxu0 0.0
    %314 = vmatpush2.msra.mxu0 0.0
    %315 = vmatprep.subr.mxu0 0.0
    %316 = vmatpush2.msra.mxu0 0.0
    %317 = vmatprep.subr.mxu0 0.0
    %318 = vmatpush2.msra.mxu0 0.0
    %319 = vmatprep.subr.mxu0 0.0
    %320 = vmatpush2.msra.mxu0 0.0
    %321 = vmatprep.subr.mxu0 0.0
    %322 = vmatpush2.msra.mxu0 0.0
    %323 = vmatprep.subr.mxu0 0.0
    %324 = vmatpush2.msra.mxu0 0.0
    %325 = vmatprep.subr.mxu0 0.0
    %326 = vmatpush2.msra.mxu0 0.0
    %327 = vmatprep.subr.mxu0 0.0
    %328 = vmatpush2.msra.mxu0 0.0
    %329 = vmatprep.subr.mxu0 0.0
    %330 = vmatpush2.msra.mxu0 0.0
    %331 = vmatprep.mubr.f32.mxu0 0.0
    %332 = vmatmul.mubr.f32.gmra.mxu0 %v244
    %v333 = vpop.f32.mrf.mxu0
    %v334 = vadd.f32 %v266, %v333
    %v335 = vpop.f32.mrf.mxu0
    %336 = vdwg.mxu0
    %v337 = vmax.f32 %v334, 0.0
    %s338 = scalar_lea.vmem [#allocation6], 256
    %v339 = vld [vmem:[%s338] sm:$0xff]
    %v340 = vld [vmem:[%s338 + $0x8] sm:$0xff]
    %v341 = vld [vmem:[%s338 + $0x10] sm:$0xff]
    %v342 = vld [vmem:[%s338 + $0x18] sm:$0xff]
    %v343 = vld [vmem:[%s338 + $0x20] sm:$0xff]
    %v344 = vld [vmem:[%s338 + $0x28] sm:$0xff]
    %v345 = vld [vmem:[%s338 + $0x30] sm:$0xff]
    %v346 = vld [vmem:[%s338 + $0x38] sm:$0xff]
    %v347 = vld [vmem:[%s338 + $0x40] sm:$0xff]
    %v348 = vld [vmem:[%s338 + $0x48] sm:$0xff]
    %v349 = vld [vmem:[%s338 + $0x50] sm:$0xff]
    %v350 = vld [vmem:[%s338 + $0x58] sm:$0xff]
    %v351 = vld [vmem:[%s338 + $0x60] sm:$0xff]
    %v352 = vld [vmem:[%s338 + $0x68] sm:$0xff]
    %v353 = vld [vmem:[%s338 + $0x70] sm:$0xff]
    %v354 = vld [vmem:[%s338 + $0x78] sm:$0xff]
    %v355 = vld [vmem:[#allocation7 + $0x3] sm:$0x1]
    %v356 = vlaneseq
    %v357 = vshrl.u32 %v356, 7
    %v358 = vsub.s32 0, %v357
    %v359 = vrot.slane %v355, %v358
    %360 = vmatprep.subr.mxu0 0.0
    %361 = vmatpush1.msra.mxu0 %v354
    %362 = vmatprep.subr.mxu0 0.0
    %363 = vmatpush1.msra.mxu0 %v353
    %364 = vmatprep.subr.mxu0 0.0
    %365 = vmatpush1.msra.mxu0 %v352
    %366 = vmatprep.subr.mxu0 0.0
    %367 = vmatpush1.msra.mxu0 %v351
    %368 = vmatprep.subr.mxu0 0.0
    %369 = vmatpush1.msra.mxu0 %v350
    %370 = vmatprep.subr.mxu0 0.0
    %371 = vmatpush1.msra.mxu0 %v349
    %372 = vmatprep.subr.mxu0 0.0
    %373 = vmatpush1.msra.mxu0 %v348
    %374 = vmatprep.subr.mxu0 0.0
    %375 = vmatpush1.msra.mxu0 %v347
    %376 = vmatprep.subr.mxu0 0.0
    %377 = vmatpush1.msra.mxu0 %v346
    %378 = vmatprep.subr.mxu0 0.0
    %379 = vmatpush1.msra.mxu0 %v345
    %380 = vmatprep.subr.mxu0 0.0
    %381 = vmatpush1.msra.mxu0 %v344
    %382 = vmatprep.subr.mxu0 0.0
    %383 = vmatpush1.msra.mxu0 %v343
    %384 = vmatprep.subr.mxu0 0.0
    %385 = vmatpush1.msra.mxu0 %v342
    %386 = vmatprep.subr.mxu0 0.0
    %387 = vmatpush1.msra.mxu0 %v341
    %388 = vmatprep.subr.mxu0 0.0
    %389 = vmatpush1.msra.mxu0 %v340
    %390 = vmatprep.subr.mxu0 0.0
    %391 = vmatpush1.msra.mxu0 %v339
    %392 = vmatprep.subr.mxu0 0.0
    %393 = vmatpush2.msra.mxu0 0.0
    %394 = vmatprep.subr.mxu0 0.0
    %395 = vmatpush2.msra.mxu0 0.0
    %396 = vmatprep.subr.mxu0 0.0
    %397 = vmatpush2.msra.mxu0 0.0
    %398 = vmatprep.subr.mxu0 0.0
    %399 = vmatpush2.msra.mxu0 0.0
    %400 = vmatprep.subr.mxu0 0.0
    %401 = vmatpush2.msra.mxu0 0.0
    %402 = vmatprep.subr.mxu0 0.0
    %403 = vmatpush2.msra.mxu0 0.0
    %404 = vmatprep.subr.mxu0 0.0
    %405 = vmatpush2.msra.mxu0 0.0
    %406 = vmatprep.subr.mxu0 0.0
    %407 = vmatpush2.msra.mxu0 0.0
    %408 = vmatprep.subr.mxu0 0.0
    %409 = vmatpush2.msra.mxu0 0.0
    %410 = vmatprep.subr.mxu0 0.0
    %411 = vmatpush2.msra.mxu0 0.0
    %412 = vmatprep.subr.mxu0 0.0
    %413 = vmatpush2.msra.mxu0 0.0
    %414 = vmatprep.subr.mxu0 0.0
    %415 = vmatpush2.msra.mxu0 0.0
    %416 = vmatprep.subr.mxu0 0.0
    %417 = vmatpush2.msra.mxu0 0.0
    %418 = vmatprep.subr.mxu0 0.0
    %419 = vmatpush2.msra.mxu0 0.0
    %420 = vmatprep.subr.mxu0 0.0
    %421 = vmatpush2.msra.mxu0 0.0
    %422 = vmatprep.subr.mxu0 0.0
    %423 = vmatpush2.msra.mxu0 0.0
    %424 = vmatprep.mubr.f32.mxu0 0.0
    %425 = vmatmul.mubr.f32.gmra.mxu0 %v337
    %v426 = vpop.f32.mrf.mxu0
    %v427 = vadd.f32 %v359, %v426
    %v428 = vpop.f32.mrf.mxu0
    %429 = vdwg.mxu0
    %v430 = vmax.f32 %v427, 0.0
    %s431 = scalar_lea.vmem [#allocation6], 384
    %v432 = vld [vmem:[%s431] sm:$0xff]
    %v433 = vld [vmem:[%s431 + $0x8] sm:$0xff]
    %v434 = vld [vmem:[%s431 + $0x10] sm:$0xff]
    %v435 = vld [vmem:[%s431 + $0x18] sm:$0xff]
    %v436 = vld [vmem:[%s431 + $0x20] sm:$0xff]
    %v437 = vld [vmem:[%s431 + $0x28] sm:$0xff]
    %v438 = vld [vmem:[%s431 + $0x30] sm:$0xff]
    %v439 = vld [vmem:[%s431 + $0x38] sm:$0xff]
    %v440 = vld [vmem:[%s431 + $0x40] sm:$0xff]
    %v441 = vld [vmem:[%s431 + $0x48] sm:$0xff]
    %v442 = vld [vmem:[%s431 + $0x50] sm:$0xff]
    %v443 = vld [vmem:[%s431 + $0x58] sm:$0xff]
    %v444 = vld [vmem:[%s431 + $0x60] sm:$0xff]
    %v445 = vld [vmem:[%s431 + $0x68] sm:$0xff]
    %v446 = vld [vmem:[%s431 + $0x70] sm:$0xff]
    %v447 = vld [vmem:[%s431 + $0x78] sm:$0xff]
    %v448 = vld [vmem:[#allocation7 + $0x4] sm:$0x1]
    %v449 = vlaneseq
    %v450 = vshrl.u32 %v449, 7
    %v451 = vsub.s32 0, %v450
    %v452 = vrot.slane %v448, %v451
    %453 = vmatprep.subr.mxu0 0.0
    %454 = vmatpush1.msra.mxu0 %v447
    %455 = vmatprep.subr.mxu0 0.0
    %456 = vmatpush1.msra.mxu0 %v446
    %457 = vmatprep.subr.mxu0 0.0
    %458 = vmatpush1.msra.mxu0 %v445
    %459 = vmatprep.subr.mxu0 0.0
    %460 = vmatpush1.msra.mxu0 %v444
    %461 = vmatprep.subr.mxu0 0.0
    %462 = vmatpush1.msra.mxu0 %v443
    %463 = vmatprep.subr.mxu0 0.0
    %464 = vmatpush1.msra.mxu0 %v442
    %465 = vmatprep.subr.mxu0 0.0
    %466 = vmatpush1.msra.mxu0 %v441
    %467 = vmatprep.subr.mxu0 0.0
    %468 = vmatpush1.msra.mxu0 %v440
    %469 = vmatprep.subr.mxu0 0.0
    %470 = vmatpush1.msra.mxu0 %v439
    %471 = vmatprep.subr.mxu0 0.0
    %472 = vmatpush1.msra.mxu0 %v438
    %473 = vmatprep.subr.mxu0 0.0
    %474 = vmatpush1.msra.mxu0 %v437
    %475 = vmatprep.subr.mxu0 0.0
    %476 = vmatpush1.msra.mxu0 %v436
    %477 = vmatprep.subr.mxu0 0.0
    %478 = vmatpush1.msra.mxu0 %v435
    %479 = vmatprep.subr.mxu0 0.0
    %480 = vmatpush1.msra.mxu0 %v434
    %481 = vmatprep.subr.mxu0 0.0
    %482 = vmatpush1.msra.mxu0 %v433
    %483 = vmatprep.subr.mxu0 0.0
    %484 = vmatpush1.msra.mxu0 %v432
    %485 = vmatprep.subr.mxu0 0.0
    %486 = vmatpush2.msra.mxu0 0.0
    %487 = vmatprep.subr.mxu0 0.0
    %488 = vmatpush2.msra.mxu0 0.0
    %489 = vmatprep.subr.mxu0 0.0
    %490 = vmatpush2.msra.mxu0 0.0
    %491 = vmatprep.subr.mxu0 0.0
    %492 = vmatpush2.msra.mxu0 0.0
    %493 = vmatprep.subr.mxu0 0.0
    %494 = vmatpush2.msra.mxu0 0.0
    %495 = vmatprep.subr.mxu0 0.0
    %496 = vmatpush2.msra.mxu0 0.0
    %497 = vmatprep.subr.mxu0 0.0
    %498 = vmatpush2.msra.mxu0 0.0
    %499 = vmatprep.subr.mxu0 0.0
    %500 = vmatpush2.msra.mxu0 0.0
    %501 = vmatprep.subr.mxu0 0.0
    %502 = vmatpush2.msra.mxu0 0.0
    %503 = vmatprep.subr.mxu0 0.0
    %504 = vmatpush2.msra.mxu0 0.0
    %505 = vmatprep.subr.mxu0 0.0
    %506 = vmatpush2.msra.mxu0 0.0
    %507 = vmatprep.subr.mxu0 0.0
    %508 = vmatpush2.msra.mxu0 0.0
    %509 = vmatprep.subr.mxu0 0.0
    %510 = vmatpush2.msra.mxu0 0.0
    %511 = vmatprep.subr.mxu0 0.0
    %512 = vmatpush2.msra.mxu0 0.0
    %513 = vmatprep.subr.mxu0 0.0
    %514 = vmatpush2.msra.mxu0 0.0
    %515 = vmatprep.subr.mxu0 0.0
    %516 = vmatpush2.msra.mxu0 0.0
    %517 = vmatprep.mubr.f32.mxu0 0.0
    %518 = vmatmul.mubr.f32.gmra.mxu0 %v430
    %v519 = vpop.f32.mrf.mxu0
    %v520 = vadd.f32 %v452, %v519
    %v521 = vpop.f32.mrf.mxu0
    %522 = vdwg.mxu0
    %523 = vst [vmem:[%s4] sm:$0xff] %v520
    // Predicated region
    $region34: #{_fused_forward.1} parent=1 // pred_check
      _
    $region35: #{_fused_forward.1} parent=1 // pred_check_branch
      %525 = sbr.rel (0) target = $region37
    $region36: #{_fused_forward.1} parent=1 // pred_region
      _
    $region37: #{_fused_forward.1} parent=1 // pred_fallthru
      _
    // Predicated region
    $region38: #{_fused_forward.1} parent=1 // pred_check
      _
    $region39: #{_fused_forward.1} parent=1 // pred_check_branch
      %527 = sbr.rel (0) target = $region41
    $region40: #{_fused_forward.1} parent=1 // pred_region
      _
    $region41: #{_fused_forward.1} parent=1 // pred_fallthru
      _
    %528 = vsyncpa [#allocation3], 1
    %529 = vsyncpa [#allocation5], 1
    %530 = vsyncpa [#allocation8], 1

</llo_original>
